<compile_context>
chip_gen: v7x
topology: tpu7x:2x2x1
jax: 0.10.0
libtpu: 0.0.40
codegen_flags: <defaults>
</compile_context>

<pallas_src>
import jax
import jax.numpy as jnp
from jax import lax
from jax.experimental import pallas as pl
from jax.experimental.pallas import tpu as pltpu


def _self_attention_kernel(x_ref, wqkv_ref, o_ref):
    """One attention instance (one batch element) per grid step.

    x_ref:    (S, d_in)        compute dtype (bf16 by default)
    wqkv_ref: (d_in, 3*d_out)  compute dtype, already transposed -> kernel does x @ W directly
    o_ref:    (S, d_out)       float32
    """
    cdt = x_ref.dtype
    d_out = o_ref.shape[-1]

    x = x_ref[...]
    w = wqkv_ref[...]

    # Fused QKV projection: one MXU matmul, f32 accumulation, no weight transpose.
    qkv = jnp.dot(x, w, preferred_element_type=jnp.float32)          # (S, 3*d_out) f32

    # Fold the 1/sqrt(d_out) scale into q instead of scaling the (S, S) score matrix.
    scale = 1.0 / jnp.sqrt(jnp.float32(d_out))
    q = (qkv[:, :d_out] * scale).astype(cdt)                         # (S, d_out)
    k = qkv[:, d_out:2 * d_out].astype(cdt)                          # (S, d_out)
    v = qkv[:, 2 * d_out:].astype(cdt)                               # (S, d_out)

    # scores = q @ k.T, expressed transpose-free by contracting the last dims of q and k.
    s = lax.dot_general(q, k, (((1,), (1,)), ((), ())),
                        preferred_element_type=jnp.float32)          # (S, S) f32

    # Numerically-stable softmax along the last axis, in f32 (matches torch.softmax(dim=-1)).
    m = jnp.max(s, axis=-1, keepdims=True)
    e = jnp.exp(s - m)
    denom = jnp.sum(e, axis=-1, keepdims=True)
    p = e * pl.reciprocal(denom, approx=True)                        # EUP reciprocal + VALU mul

    # context = softmax(scores) @ v  (probs in compute dtype for the MXU, f32 accumulation).
    ctx = jnp.dot(p.astype(cdt), v, preferred_element_type=jnp.float32)
    o_ref[...] = ctx.astype(o_ref.dtype)


def self_attention_v2(x, w_query, w_key, w_value, *, compute_dtype=jnp.bfloat16):
    """SelfAttentionV2 forward.

    x:   (S, d_in) exactly like the PyTorch module, or (B, S, d_in) to batch many instances
         through one pallas_call (leading batch axis becomes a "parallel" grid dimension).
    w_*: (d_out, d_in) PyTorch nn.Linear weights (qkv_bias=False).
    Returns float32 context vectors of shape (S, d_out) / (B, S, d_out).
    """
    squeeze = (x.ndim == 2)
    if squeeze:
        x = x[None]
    B, S, d_in = x.shape
    d_out = w_query.shape[0]

    # Fuse + pre-transpose the projection weights once in the wrapper: (d_in, 3*d_out).
    w_qkv = jnp.concatenate([w_query.T, w_key.T, w_value.T], axis=1)

    x_c = x.astype(compute_dtype)
    w_c = w_qkv.astype(compute_dtype)

    elem = jnp.dtype(compute_dtype).itemsize
    flops = 2 * B * S * d_in * (3 * d_out) + 2 * (2 * B * S * S * d_out)   # QKV + QK^T + PV
    cost = pl.CostEstimate(
        flops=int(flops),
        transcendentals=int(B * S * S),                                    # exp in the softmax
        bytes_accessed=int(x_c.size * elem + w_c.size * elem + B * S * d_out * 4),
    )

    out = pl.pallas_call(
        _self_attention_kernel,
        out_shape=jax.ShapeDtypeStruct((B, S, d_out), jnp.float32),
        grid=(B,),
        in_specs=[
            pl.BlockSpec((None, S, d_in), lambda b: (b, 0, 0)),     # one example per grid step
            pl.BlockSpec((d_in, 3 * d_out), lambda b: (0, 0)),      # fused weight, resident
        ],
        out_specs=pl.BlockSpec((None, S, d_out), lambda b: (b, 0, 0)),
        compiler_params=pltpu.CompilerParams(
            dimension_semantics=("parallel",),       # megacore-shardable batch axis on v7x
            vmem_limit_bytes=32 * 1024 * 1024,
        ),
        cost_estimate=cost,
    )(x_c, w_c)

    # TODO(synk): for production sizes this should become a flash-style kernel (query-tile grid +
    # streamed kv tiles with online softmax) and a lane-dense (multiple-of-128) output slab;
    # unnecessary at these toy sizes where everything fits a single VMEM block.
    return out[0] if squeeze else out


def _reference(x, wq, wk, wv):
    q = x @ wq.T
    k = x @ wk.T
    v = x @ wv.T
    s = (q @ k.T) / jnp.sqrt(jnp.float32(k.shape[-1]))
    w = jax.nn.softmax(s, axis=-1)
    return w @ v


if __name__ == "__main__":
    seq, d_in, d_out = 8, 32, 16
    batch = 4

    key = jax.random.PRNGKey(0)
    kx, kq, kk, kv, kb = jax.random.split(key, 5)

    x = jax.random.normal(kx, (seq, d_in), dtype=jnp.float32)
    # Deterministic init mimicking nn.Linear's default: U(-1/sqrt(d_in), 1/sqrt(d_in))
    bound = 1.0 / (d_in ** 0.5)
    w_query = jax.random.uniform(kq, (d_out, d_in), jnp.float32, -bound, bound)
    w_key = jax.random.uniform(kk, (d_out, d_in), jnp.float32, -bound, bound)
    w_value = jax.random.uniform(kv, (d_out, d_in), jnp.float32, -bound, bound)

    # Tolerance reflects bf16 MXU inputs (f32 accumulation); pass compute_dtype=jnp.float32
    # to the wrapper for tighter numerics.
    ATOL = RTOL = 5e-2

    # 1) Exact module semantics: 2-D input (seq, d_in), as in the PyTorch forward.
    out = jax.block_until_ready(self_attention_v2(x, w_query, w_key, w_value))
    ref = _reference(x, w_query, w_key, w_value)
    assert out.shape == (seq, d_out)
    assert jnp.allclose(out, ref, atol=ATOL, rtol=RTOL), "2-D output mismatch vs reference"

    # 2) Batched use: many instances through one pallas_call with a parallel grid axis.
    xb = jax.random.normal(kb, (batch, seq, d_in), dtype=jnp.float32)
    out_b = jax.block_until_ready(self_attention_v2(xb, w_query, w_key, w_value))
    ref_b = jax.vmap(lambda xi: _reference(xi, w_query, w_key, w_value))(xb)
    assert out_b.shape == (batch, seq, d_out)
    assert jnp.allclose(out_b, ref_b, atol=ATOL, rtol=RTOL), "batched output mismatch vs reference"

    print("KERNEL_OK")
</pallas_src>

<mosaic_0001>
module attributes {stable_mosaic.version = 11 : i64} {
  func.func @_self_attention_kernel(%arg0: i32, %arg1: memref<1x8x32xbf16, #tpu.memory_space<vmem>>, %arg2: memref<32x48xbf16, #tpu.memory_space<vmem>>, %arg3: memref<1x8x16xf32, #tpu.memory_space<vmem>>) attributes {dimension_semantics = [#tpu.dimension_semantics<parallel>], iteration_bounds = array<i64: 1>, scalar_prefetch = 0 : i64, scratch_operands = 0 : i64, tpu.core_type = #tpu.core_type<tc>, window_params = [{transform_indices = @transform_0, window_bounds = array<i64: 1, 8, 32>}, {pipeline_mode = #tpu.pipeline_mode<synchronous>, transform_indices = @transform_1, window_bounds = array<i64: 32, 48>}, {transform_indices = @transform_2, window_bounds = array<i64: 1, 8, 16>}]} {
    %c0 = arith.constant 0 : index
    %c0_0 = arith.constant 0 : index
    %c0_1 = arith.constant 0 : index
    %0 = vector.load %arg1[%c0, %c0_0, %c0_1] : memref<1x8x32xbf16, #tpu.memory_space<vmem>>, vector<1x8x32xbf16>
    %1 = vector.shape_cast %0 : vector<1x8x32xbf16> to vector<8x32xbf16>
    %c0_2 = arith.constant 0 : index
    %c0_3 = arith.constant 0 : index
    %2 = vector.load %arg2[%c0_2, %c0_3] : memref<32x48xbf16, #tpu.memory_space<vmem>>, vector<32x48xbf16>
    %cst = arith.constant dense<0.000000e+00> : vector<8x48xf32>
    %3 = tpu.matmul %1, %2, %cst {dimension_numbers = #tpu.dot_dimension_numbers<[1], [0], [0], [1], [0, 0, 1, 1], [], []>} : vector<8x32xbf16>, vector<32x48xbf16>, vector<8x48xf32> -> vector<8x48xf32>
    %cst_4 = arith.constant 1.600000e+01 : f32
    %4 = math.sqrt %cst_4 : f32
    %cst_5 = arith.constant 1.000000e+00 : f32
    %5 = arith.divf %cst_5, %4 : f32
    %6 = vector.extract_strided_slice %3 {offsets = [0, 0], sizes = [8, 16], strides = [1, 1]} : vector<8x48xf32> to vector<8x16xf32>
    %7 = vector.broadcast %5 : f32 to vector<8x16xf32>
    %8 = arith.mulf %6, %7 : vector<8x16xf32>
    %9 = arith.truncf %8 : vector<8x16xf32> to vector<8x16xbf16>
    %10 = vector.extract_strided_slice %3 {offsets = [0, 16], sizes = [8, 16], strides = [1, 1]} : vector<8x48xf32> to vector<8x16xf32>
    %11 = arith.truncf %10 : vector<8x16xf32> to vector<8x16xbf16>
    %12 = vector.extract_strided_slice %3 {offsets = [0, 32], sizes = [8, 16], strides = [1, 1]} : vector<8x48xf32> to vector<8x16xf32>
    %13 = arith.truncf %12 : vector<8x16xf32> to vector<8x16xbf16>
    %cst_6 = arith.constant dense<0.000000e+00> : vector<8x8xf32>
    %14 = tpu.matmul %9, %11, %cst_6 {dimension_numbers = #tpu.dot_dimension_numbers<[1], [1], [0], [0], [0, 0, 1, 0], [], []>} : vector<8x16xbf16>, vector<8x16xbf16>, vector<8x8xf32> -> vector<8x8xf32>
    %cst_7 = arith.constant dense<0xFF800000> : vector<8xf32>
    %15 = vector.multi_reduction <maximumf>, %14, %cst_7 [1] : vector<8x8xf32> to vector<8xf32>
    %16 = vector.shape_cast %15 : vector<8xf32> to vector<8x1xf32>
    %17 = vector.broadcast %16 : vector<8x1xf32> to vector<8x8xf32>
    %18 = arith.subf %14, %17 : vector<8x8xf32>
    %19 = math.exp %18 : vector<8x8xf32>
    %cst_8 = arith.constant dense<0.000000e+00> : vector<8xf32>
    %20 = vector.multi_reduction <add>, %19, %cst_8 [1] : vector<8x8xf32> to vector<8xf32>
    %21 = vector.shape_cast %20 : vector<8xf32> to vector<8x1xf32>
    %22 = tpu.reciprocal %21 {approx = true} : vector<8x1xf32> -> vector<8x1xf32>
    %23 = vector.broadcast %22 : vector<8x1xf32> to vector<8x8xf32>
    %24 = arith.mulf %19, %23 : vector<8x8xf32>
    %25 = arith.truncf %24 : vector<8x8xf32> to vector<8x8xbf16>
    %cst_9 = arith.constant dense<0.000000e+00> : vector<8x16xf32>
    %26 = tpu.matmul %25, %13, %cst_9 {dimension_numbers = #tpu.dot_dimension_numbers<[1], [0], [0], [1], [0, 0, 1, 1], [], []>} : vector<8x8xbf16>, vector<8x16xbf16>, vector<8x16xf32> -> vector<8x16xf32>
    %c0_10 = arith.constant 0 : index
    %c0_11 = arith.constant 0 : index
    %c0_12 = arith.constant 0 : index
    %27 = vector.load %arg3[%c0_10, %c0_11, %c0_12] : memref<1x8x16xf32, #tpu.memory_space<vmem>>, vector<1x8x16xf32>
    %28 = vector.shape_cast %27 : vector<1x8x16xf32> to vector<8x16xf32>
    %29 = vector.shape_cast %26 : vector<8x16xf32> to vector<1x8x16xf32>
    tpu.vector_store %arg3[%c0_10, %c0_11, %c0_12], %29 {strides = array<i32>} : memref<1x8x16xf32, #tpu.memory_space<vmem>>, vector<1x8x16xf32>,
    return
  }
  func.func @transform_0(%arg0: i32) -> (i32, i32, i32) {
    %c0_i32 = arith.constant 0 : i32
    %c0_i32_0 = arith.constant 0 : i32
    %c0_i32_1 = arith.constant 0 : i32
    return %arg0, %c0_i32, %c0_i32_0 : i32, i32, i32
  }
  func.func @transform_1(%arg0: i32) -> (i32, i32) {
    %c0_i32 = arith.constant 0 : i32
    %c0_i32_0 = arith.constant 0 : i32
    %c0_i32_1 = arith.constant 0 : i32
    return %c0_i32, %c0_i32_0 : i32, i32
  }
  func.func @transform_2(%arg0: i32) -> (i32, i32, i32) {
    %c0_i32 = arith.constant 0 : i32
    %c0_i32_0 = arith.constant 0 : i32
    %c0_i32_1 = arith.constant 0 : i32
    return %arg0, %c0_i32, %c0_i32_0 : i32, i32, i32
  }
}

</mosaic_0001>

<llo_original>
// kernel: tpu_custom_call.1
$region0: #{tpu_custom_call.1}
  #allocation0 [shape = 'u32[]', space=smem, size = 0x4, offset = 0x4, fixed_abs, tag = 'smem constant byte address 0x4 - core index']
  #allocation1 [shape = 'u32[144,128]{1,0:T(1,128)}', space=vmem, size = 0x12000, scoped, tag = 'internal scratch']
  %s0 = inlined_call_operand.hbm [shape: bf16[1,8,32], index: 0, kind: input, shape index: {}]
  %s1 = inlined_call_operand.hbm [shape: bf16[32,48], index: 1, kind: input, shape index: {}]
  %s2 = inlined_call_operand.hbm [shape: f32[1,8,16], index: 2, kind: output, shape index: {}]
  %s3 = sld [smem:[#allocation0]]
  $region26: #{tpu_custom_call.1} parent=0
    _
  %s5 = ssub.s32 1, %s3
  %s6 = scalar_select 0, %s5, %s3
  $region1: #{tpu_custom_call.1} parent=0
    #allocation2 [shape = 'u8[2048]{0}', space=vmem, size = 0x800, scoped, tag = 'input window, operand 0, single buffered']
    #allocation3 [shape = 's32[1]{0}', space=sflag, size = 0x4, scoped, tag = 'scoped memory for tpu_custom_call.1']
    #allocation4 [shape = 's32[1]{0}', space=sflag, size = 0x4, scoped, tag = 'scoped memory for tpu_custom_call.1']
    #allocation5 [shape = 'u8[8192]{0}', space=vmem, size = 0x2000, scoped, tag = 'input window, operand 1, single buffered']
    #allocation6 [shape = 's32[1]{0}', space=sflag, size = 0x4, scoped, tag = 'scoped memory for tpu_custom_call.1']
    #allocation7 [shape = 'u8[4096]{0}', space=vmem, size = 0x1000, scoped, tag = 'output window, operand 0, single buffered']
    %7 = vsyncpa [#allocation3], 0
    %8 = vsyncpa [#allocation6], 0
    %9 = vsyncpa [#allocation4], 0
    // Predicated region
    $region2: #{tpu_custom_call.1} parent=1 // pred_check
      _
    $region3: #{tpu_custom_call.1} parent=1 // pred_check_branch
      %11 = sbr.rel (0) target = $region5
    $region4: #{tpu_custom_call.1} parent=1 // pred_region
      %s13 = ssub.s32 64, 64
      %14 = vsyncadd [#allocation3], %s13
      %s16 = sshll.u32 [#allocation2], 4
      %s17 = int_to_ptr.vmem [resolvable:$true] %s16
      %19 = dma.hbm_to_vmem [thread:$0]  %s0, 64, %s17, [#allocation3]
    $region5: #{tpu_custom_call.1} parent=1 // pred_fallthru
      _
    // Predicated region
    $region6: #{tpu_custom_call.1} parent=1 // pred_check
      _
    $region7: #{tpu_custom_call.1} parent=1 // pred_check_branch
      %21 = sbr.rel (0) target = $region9
    $region8: #{tpu_custom_call.1} parent=1 // pred_region
      %s23 = ssub.s32 256, 256
      %24 = vsyncadd [#allocation6], %s23
      %s25 = sshll.u32 [#allocation5], 4
      %s26 = int_to_ptr.vmem [resolvable:$true] %s25
      %31 = dma.hbm_to_vmem [thread:$0]  %s1, 256, %s26, [#allocation6], 64, 64, 4
    $region9: #{tpu_custom_call.1} parent=1 // pred_fallthru
      _
    // Predicated region
    $region10: #{tpu_custom_call.1} parent=1 // pred_check
      _
    $region11: #{tpu_custom_call.1} parent=1 // pred_check_branch
      %33 = sbr.rel (0) target = $region13
    $region12: #{tpu_custom_call.1} parent=1 // pred_region
      %34 = dma.done [#allocation3], 64
    $region13: #{tpu_custom_call.1} parent=1 // pred_fallthru
      _
    // Predicated region
    $region14: #{tpu_custom_call.1} parent=1 // pred_check
      _
    $region15: #{tpu_custom_call.1} parent=1 // pred_check_branch
      %36 = sbr.rel (0) target = $region17
    $region16: #{tpu_custom_call.1} parent=1 // pred_region
      %37 = dma.done [#allocation6], 256
    $region17: #{tpu_custom_call.1} parent=1 // pred_fallthru
      _
    %v39 = vld [vmem:[#allocation2] sm:$0xf]
    %v40 = vld [vmem:[#allocation5] sm:$0xf]
    %v41 = vld [vmem:[#allocation5 + $0x4] sm:$0xf]
    %v42 = vld [vmem:[#allocation5 + $0x8] sm:$0xf]
    %v43 = vld [vmem:[#allocation5 + $0xc] sm:$0xf]
    %v48 = vunpack.c.l.b16 %v40
    %v49 = vunpack.c.l.b16 %v41
    %v50 = vunpack.c.l.b16 %v42
    %v51 = vunpack.c.l.b16 %v43
    %v52 = vpack.c.b16 %v49, %v48
    %v53 = vpack.c.b16 %v51, %v50
    %vm56 = vcmask 261120
    %v58 = vsel %vm56, %v39, 0
    %60 = vmatprep.subr.bf16.mxu0 0
    %61 = vmatpush1.bf16.msra.mxu0 %v52
    %62 = vmatprep.subr.bf16.mxu0 0
    %63 = vmatpush1.bf16.msra.mxu0 %v53
    %64 = vmatprep.subr.bf16.mxu0 0
    %65 = vmatpush1.bf16.msra.mxu0 0
    %66 = vmatprep.subr.bf16.mxu0 0
    %67 = vmatpush1.bf16.msra.mxu0 0
    %68 = vmatprep.subr.bf16.mxu0 0
    %69 = vmatpush1.bf16.msra.mxu0 0
    %70 = vmatprep.subr.bf16.mxu0 0
    %71 = vmatpush1.bf16.msra.mxu0 0
    %72 = vmatprep.subr.bf16.mxu0 0
    %73 = vmatpush1.bf16.msra.mxu0 0
    %74 = vmatprep.subr.bf16.mxu0 0
    %75 = vmatpush1.bf16.msra.mxu0 0
    %76 = vmatprep.subr.bf16.mxu0 0
    %77 = vmatpush1.bf16.msra.mxu0 0
    %78 = vmatprep.subr.bf16.mxu0 0
    %79 = vmatpush1.bf16.msra.mxu0 0
    %80 = vmatprep.subr.bf16.mxu0 0
    %81 = vmatpush1.bf16.msra.mxu0 0
    %82 = vmatprep.subr.bf16.mxu0 0
    %83 = vmatpush1.bf16.msra.mxu0 0
    %84 = vmatprep.subr.bf16.mxu0 0
    %85 = vmatpush1.bf16.msra.mxu0 0
    %86 = vmatprep.subr.bf16.mxu0 0
    %87 = vmatpush1.bf16.msra.mxu0 0
    %88 = vmatprep.subr.bf16.mxu0 0
    %89 = vmatpush1.bf16.msra.mxu0 0
    %90 = vmatprep.subr.bf16.mxu0 0
    %91 = vmatpush1.bf16.msra.mxu0 0
    %92 = vmatprep.mubr.bf16.mxu0 0
    %93 = vmatmul.mubr.bf16.gmra.mrb[0].mxu0 %v58
    %v94 = vpop.f32.mrb[0].mxu0
    %v95 = vadd.f32 0.0, %v94
    %v96 = vpop.f32.mrb[0].mxu0
    %v97 = vpop.f32.mrb[0].mxu0
    %v98 = vpop.f32.mrb[0].mxu0
    %99 = vdwg.mxu0
    %v100 = vmul.f32 %v95, 0.25
    %v101 = vpack.c.bf16 %v100, %v100
    %v102 = vpack.c.bf16 %v95, %v95
    %104 = vrot.lane.b32.xlu0 %v102, 112
    %v105 = vpop.permute.xlu0 %104
    %vm106 = vcmask 130048
    %v108 = vsel %vm106, %v101, 0
    %v111 = vsel %vm106, %v105, 0
    %113 = vmatprep.subr.bf16.mxu0 0
    %114 = vmatpush1.bf16.xpose.msra.mxu0 %v111
    %115 = vmatprep.subr.bf16.mxu0 0
    %116 = vmatpush1.bf16.xpose.msra.mxu0 0
    %117 = vmatprep.subr.bf16.mxu0 0
    %118 = vmatpush1.bf16.xpose.msra.mxu0 0
    %119 = vmatprep.subr.bf16.mxu0 0
    %120 = vmatpush1.bf16.xpose.msra.mxu0 0
    %121 = vmatprep.subr.bf16.mxu0 0
    %122 = vmatpush1.bf16.xpose.msra.mxu0 0
    %123 = vmatprep.subr.bf16.mxu0 0
    %124 = vmatpush1.bf16.xpose.msra.mxu0 0
    %125 = vmatprep.subr.bf16.mxu0 0
    %126 = vmatpush1.bf16.xpose.msra.mxu0 0
    %127 = vmatprep.subr.bf16.mxu0 0
    %128 = vmatpush1.bf16.xpose.msra.mxu0 0
    %129 = vmatprep.subr.bf16.mxu0 0
    %130 = vmatpush1.bf16.xpose.msra.mxu0 0
    %131 = vmatprep.subr.bf16.mxu0 0
    %132 = vmatpush1.bf16.xpose.msra.mxu0 0
    %133 = vmatprep.subr.bf16.mxu0 0
    %134 = vmatpush1.bf16.xpose.msra.mxu0 0
    %135 = vmatprep.subr.bf16.mxu0 0
    %136 = vmatpush1.bf16.xpose.msra.mxu0 0
    %137 = vmatprep.subr.bf16.mxu0 0
    %138 = vmatpush1.bf16.xpose.msra.mxu0 0
    %139 = vmatprep.subr.bf16.mxu0 0
    %140 = vmatpush1.bf16.xpose.msra.mxu0 0
    %141 = vmatprep.subr.bf16.mxu0 0
    %142 = vmatpush1.bf16.xpose.msra.mxu0 0
    %143 = vmatprep.subr.bf16.mxu0 0
    %144 = vmatpush1.bf16.xpose.msra.mxu0 0
    %145 = vmatprep.mubr.bf16.mxu0 0
    %146 = vmatmul.mubr.bf16.gmra.mrb[0].mxu0 %v108
    %v147 = vpop.f32.mrb[0].mxu0
    %v148 = vadd.f32 0.0, %v147
    %v149 = vpop.f32.mrb[0].mxu0
    %v150 = vpop.f32.mrb[0].mxu0
    %v151 = vpop.f32.mrb[0].mxu0
    %152 = vdwg.mxu0
    %vm153 = vcmask 64512
    %v154 = vsel %vm153, %v148, -inf
    %155 = vmax.xlane.f32.xlu0 %v154
    %v156 = vpop.xlane.xlu0 %155
    %v157 = vsub.f32 %v148, %v156
    %v158 = vmul.f32 %v157, 1.442695
    %v159 = vpow.pop %v158
    %v160 = vsel %vm153, %v159, 0.0
    %161 = vadd.xlane.f32.xlu0 %v160
    %v162 = vpop.xlane.xlu0 %161
    %v163 = vrcp.pop %v162
    %v164 = vmul.f32 %v159, %v163
    %v165 = vpack.c.bf16 %v164, %v164
    %166 = vrot.lane.b32.xlu0 %v102, 96
    %v167 = vpop.permute.xlu0 %166
    %v169 = vsel %vm153, %v165, 0
    %vm171 = vcmask 1043456
    %v173 = vsel %vm171, %v167, 0
    %175 = vmatprep.subr.bf16.mxu0 0
    %176 = vmatpush1.bf16.msra.mxu0 %v173
    %177 = vmatprep.subr.bf16.mxu0 0
    %178 = vmatpush1.bf16.msra.mxu0 0
    %179 = vmatprep.subr.bf16.mxu0 0
    %180 = vmatpush1.bf16.msra.mxu0 0
    %181 = vmatprep.subr.bf16.mxu0 0
    %182 = vmatpush1.bf16.msra.mxu0 0
    %183 = vmatprep.subr.bf16.mxu0 0
    %184 = vmatpush1.bf16.msra.mxu0 0
    %185 = vmatprep.subr.bf16.mxu0 0
    %186 = vmatpush1.bf16.msra.mxu0 0
    %187 = vmatprep.subr.bf16.mxu0 0
    %188 = vmatpush1.bf16.msra.mxu0 0
    %189 = vmatprep.subr.bf16.mxu0 0
    %190 = vmatpush1.bf16.msra.mxu0 0
    %191 = vmatprep.subr.bf16.mxu0 0
    %192 = vmatpush1.bf16.msra.mxu0 0
    %193 = vmatprep.subr.bf16.mxu0 0
    %194 = vmatpush1.bf16.msra.mxu0 0
    %195 = vmatprep.subr.bf16.mxu0 0
    %196 = vmatpush1.bf16.msra.mxu0 0
    %197 = vmatprep.subr.bf16.mxu0 0
    %198 = vmatpush1.bf16.msra.mxu0 0
    %199 = vmatprep.subr.bf16.mxu0 0
    %200 = vmatpush1.bf16.msra.mxu0 0
    %201 = vmatprep.subr.bf16.mxu0 0
    %202 = vmatpush1.bf16.msra.mxu0 0
    %203 = vmatprep.subr.bf16.mxu0 0
    %204 = vmatpush1.bf16.msra.mxu0 0
    %205 = vmatprep.subr.bf16.mxu0 0
    %206 = vmatpush1.bf16.msra.mxu0 0
    %207 = vmatprep.mubr.bf16.mxu0 0
    %208 = vmatmul.mubr.bf16.gmra.mrb[0].mxu0 %v169
    %v209 = vpop.f32.mrb[0].mxu0
    %v210 = vadd.f32 0.0, %v209
    %v211 = vpop.f32.mrb[0].mxu0
    %v212 = vpop.f32.mrb[0].mxu0
    %v213 = vpop.f32.mrb[0].mxu0
    %214 = vdwg.mxu0
    %215 = vst.msk [vmem:[#allocation7] sm:$0xff] %vm106, %v210
    // Predicated region
    $region18: #{tpu_custom_call.1} parent=1 // pred_check
      _
    $region19: #{tpu_custom_call.1} parent=1 // pred_check_branch
      %217 = sbr.rel (0) target = $region21
    $region20: #{tpu_custom_call.1} parent=1 // pred_region
      %s219 = ssub.s32 128, 128
      %220 = vsyncadd [#allocation4], %s219
      %s222 = sshll.u32 [#allocation7], 4
      %s223 = int_to_ptr.vmem [resolvable:$true] %s222
      %225 = dma.vmem_to_hbm [thread:$0]  %s223, 128, %s2, [#allocation4]
    $region21: #{tpu_custom_call.1} parent=1 // pred_fallthru
      _
    // Predicated region
    $region22: #{tpu_custom_call.1} parent=1 // pred_check
      _
    $region23: #{tpu_custom_call.1} parent=1 // pred_check_branch
      %227 = sbr.rel (0) target = $region25
    $region24: #{tpu_custom_call.1} parent=1 // pred_region
      %228 = dma.done [#allocation4], 128
    $region25: #{tpu_custom_call.1} parent=1 // pred_fallthru
      _
    %229 = vsyncpa [#allocation3], 1
    %230 = vsyncpa [#allocation6], 1
    %231 = vsyncpa [#allocation4], 1

</llo_original>
